<compile_context>
chip_gen: v7x
topology: tpu7x:2x2x1
jax: 0.10.0
libtpu: 0.0.40
codegen_flags: <defaults>
</compile_context>

<pallas_src>
import math

import jax
import jax.numpy as jnp
from jax.experimental import pallas as pl
from jax.experimental.pallas import tpu as pltpu

KSIZE = 7
PAD = 3


def spatial_attention_kernel(x_ref, m_ref, o_ref):
    # x_ref: (bt, C, HW)   lane-dense input block
    # m_ref: (2*HW, HW)    bf16 dense conv operator (avg rows over max rows)
    # o_ref: (bt, HW)      sigmoid(conv7x7([avg, max])) output, lane-dense
    x = x_ref[...]
    c = x.shape[1]
    # Channel reductions: mean via f32-accumulated sum * 1/C, max in the
    # native dtype; only the two (bt, HW) results are cast afterwards.
    avg = jnp.sum(x, axis=1, dtype=jnp.float32) * (1.0 / c)
    mx = jnp.max(x, axis=1).astype(jnp.float32)

    # Single fused MXU matmul: LHS = [avg | max] (bt, 2*HW) in bf16, bf16 RHS,
    # f32 accumulation.
    lhs = jnp.concatenate([avg, mx], axis=-1).astype(jnp.bfloat16)
    acc = jnp.dot(lhs, m_ref[...], preferred_element_type=jnp.float32)

    o_ref[...] = jax.nn.sigmoid(acc).astype(o_ref.dtype)


def build_conv_operator(weight, H, W, dtype=jnp.bfloat16):
    """Bake the zero-padded 7x7 cross-correlation into one dense matrix.

    Returns m of shape (2*H*W, H*W) such that
        out_flat = concat([avg_flat, max_flat], axis=-1) @ m
    matches nn.Conv2d(2, 1, 7, padding=3, bias=False) on row-major-flattened
    spatial maps.  Build this ONCE per weight update and reuse it across
    forward calls (the 5-D gather below costs more than the kernel itself).
    """
    w = weight.reshape(2, KSIZE, KSIZE).astype(jnp.float32)
    r = jnp.arange(H)
    q = jnp.arange(W)
    dr = r[:, None] - r[None, :] + PAD            # (H_in, H_out) vertical tap
    dq = q[:, None] - q[None, :] + PAD            # (W_in, W_out) horizontal tap
    vr = (dr >= 0) & (dr < KSIZE)
    vq = (dq >= 0) & (dq < KSIZE)
    drc = jnp.clip(dr, 0, KSIZE - 1)
    dqc = jnp.clip(dq, 0, KSIZE - 1)
    # taps[c, ri, qi, ro, qo] = w[c, ri - ro + PAD, qi - qo + PAD]
    taps = w[:, drc[:, None, :, None], dqc[None, :, None, :]]     # (2,H,W,H,W)
    valid = (vr[:, None, :, None] & vq[None, :, None, :])[None]
    m = jnp.where(valid, taps, 0.0).reshape(2 * H * W, H * W)
    return m.astype(dtype)


def _pick_block_b(B, C, HW):
    # Per-grid-step fixed overhead is ~0.35us.  At the small spatial sizes
    # this module sees, a single grid step wins on every generation; only
    # split the batch axis (v7x megacore) when per-step work is meaningful.
    flops_per_sample = 4 * HW * HW + 2 * C * HW
    if B * flops_per_sample < 2_000_000:
        return B                                  # single grid step
    half = (B + 1) // 2
    bt = ((half + 7) // 8) * 8                    # multiple of 8 (sublane rule
                                                  # on the 2-D output block)
    return min(B, max(8, min(64, bt)))


def spatial_attention(x, conv_op, *, block_b=None):
    """x: (B, C, H, W); conv_op: (2*H*W, H*W) from build_conv_operator()."""
    B, C, H, W = x.shape
    HW = H * W
    assert conv_op.shape == (2 * HW, HW)
    bt = _pick_block_b(B, C, HW) if block_b is None else block_b
    grid = (pl.cdiv(B, bt),)                      # partial tail blocks are
                                                  # masked on store

    x_flat = x.reshape(B, C, HW)                  # lane-dense input layout

    out = pl.pallas_call(
        spatial_attention_kernel,
        out_shape=jax.ShapeDtypeStruct((B, HW), x.dtype),
        grid_spec=pltpu.PrefetchScalarGridSpec(
            num_scalar_prefetch=0,
            grid=grid,
            in_specs=[
                pl.BlockSpec((bt, C, HW), lambda b: (b, 0, 0)),
                # Same block index every step -> the conv operator stays
                # VMEM-resident across the whole grid (no re-DMA).
                pl.BlockSpec((2 * HW, HW), lambda b: (0, 0)),
            ],
            out_specs=pl.BlockSpec((bt, HW), lambda b: (b, 0)),
        ),
        compiler_params=pltpu.CompilerParams(
            dimension_semantics=("parallel",),
        ),
    )(x_flat, conv_op)
    return out.reshape(B, 1, H, W)


def spatial_attention_from_weight(x, weight, **kw):
    """Convenience wrapper; prefer build_conv_operator() once + reuse."""
    _, _, H, W = x.shape
    return spatial_attention(x, build_conv_operator(weight, H, W), **kw)


def reference(x, weight):
    avg = jnp.mean(x, axis=1, keepdims=True)
    mx = jnp.max(x, axis=1, keepdims=True)
    cat = jnp.concatenate([avg, mx], axis=1)
    out = jax.lax.conv_general_dilated(
        cat, weight, window_strides=(1, 1),
        padding=((PAD, PAD), (PAD, PAD)),
        dimension_numbers=("NCHW", "OIHW", "NCHW"),
        precision=jax.lax.Precision.HIGHEST)
    return jax.nn.sigmoid(out)


if __name__ == "__main__":
    key = jax.random.PRNGKey(0)
    kx, kw = jax.random.split(key)

    B, C, H, W = 2, 4, 16, 16
    x = jax.random.normal(kx, (B, C, H, W), dtype=jnp.float32)

    # Deterministic conv weight, shaped like nn.Conv2d(2, 1, 7, bias=False):
    # (out=1, in=2, 7, 7), kaiming-uniform-like bound.
    fan_in = 2 * KSIZE * KSIZE
    bound = 1.0 / math.sqrt(fan_in)
    weight = jax.random.uniform(kw, (1, 2, KSIZE, KSIZE), jnp.float32,
                                minval=-bound, maxval=bound)

    # Build the dense conv operator once (per weight), reuse across calls.
    conv_op = jax.block_until_ready(build_conv_operator(weight, H, W))

    out = spatial_attention(x, conv_op)
    jax.block_until_ready(out)

    ref = reference(x, weight)
    assert out.shape == (B, 1, H, W)
    # bf16 MXU inputs with f32 accumulation: sigmoid outputs land within a few
    # 1e-3 of the Precision.HIGHEST f32 reference; indexing bugs shift O(0.1).
    assert jnp.allclose(out, ref, atol=3e-3, rtol=0.0), "mismatch vs reference"

    print("KERNEL_OK")
</pallas_src>

<mosaic_0001>
module attributes {stable_mosaic.version = 11 : i64} {
  func.func @spatial_attention_kernel(%arg0: i32, %arg1: memref<2x4x256xf32, #tpu.memory_space<vmem>>, %arg2: memref<512x256xbf16, #tpu.memory_space<vmem>>, %arg3: memref<2x256xf32, #tpu.memory_space<vmem>>) attributes {dimension_semantics = [#tpu.dimension_semantics<parallel>], iteration_bounds = array<i64: 1>, scalar_prefetch = 0 : i64, scratch_operands = 0 : i64, tpu.core_type = #tpu.core_type<tc>, window_params = [{transform_indices = @transform_0, window_bounds = array<i64: 2, 4, 256>}, {pipeline_mode = #tpu.pipeline_mode<synchronous>, transform_indices = @transform_1, window_bounds = array<i64: 512, 256>}, {transform_indices = @transform_2, window_bounds = array<i64: 2, 256>}]} {
    %c0 = arith.constant 0 : index
    %c0_0 = arith.constant 0 : index
    %c0_1 = arith.constant 0 : index
    %0 = vector.load %arg1[%c0, %c0_0, %c0_1] : memref<2x4x256xf32, #tpu.memory_space<vmem>>, vector<2x4x256xf32>
    %cst = arith.constant dense<0.000000e+00> : vector<2x256xf32>
    %1 = vector.multi_reduction <add>, %0, %cst [1] : vector<2x4x256xf32> to vector<2x256xf32>
    %cst_2 = arith.constant 2.500000e-01 : f32
    %2 = vector.broadcast %cst_2 : f32 to vector<2x256xf32>
    %3 = arith.mulf %1, %2 : vector<2x256xf32>
    %cst_3 = arith.constant dense<0xFF800000> : vector<2x256xf32>
    %4 = vector.multi_reduction <maximumf>, %0, %cst_3 [1] : vector<2x4x256xf32> to vector<2x256xf32>
    %5 = tpu.concatenate %3, %4 in 1 : vector<2x256xf32>, vector<2x256xf32> -> vector<2x512xf32>
    %6 = arith.truncf %5 : vector<2x512xf32> to vector<2x512xbf16>
    %c0_4 = arith.constant 0 : index
    %c0_5 = arith.constant 0 : index
    %7 = vector.load %arg2[%c0_4, %c0_5] : memref<512x256xbf16, #tpu.memory_space<vmem>>, vector<512x256xbf16>
    %cst_6 = arith.constant dense<0.000000e+00> : vector<2x256xf32>
    %8 = tpu.matmul %6, %7, %cst_6 {dimension_numbers = #tpu.dot_dimension_numbers<[1], [0], [0], [1], [0, 0, 1, 1], [], []>} : vector<2x512xbf16>, vector<512x256xbf16>, vector<2x256xf32> -> vector<2x256xf32>
    %9 = arith.negf %8 : vector<2x256xf32>
    %10 = math.exp %9 : vector<2x256xf32>
    %cst_7 = arith.constant 1.000000e+00 : f32
    %11 = vector.broadcast %cst_7 : f32 to vector<2x256xf32>
    %12 = arith.addf %11, %10 : vector<2x256xf32>
    %13 = arith.divf %11, %12 : vector<2x256xf32>
    %c0_8 = arith.constant 0 : index
    %c0_9 = arith.constant 0 : index
    %14 = vector.load %arg3[%c0_8, %c0_9] : memref<2x256xf32, #tpu.memory_space<vmem>>, vector<2x256xf32>
    tpu.vector_store %arg3[%c0_8, %c0_9], %13 {strides = array<i32>} : memref<2x256xf32, #tpu.memory_space<vmem>>, vector<2x256xf32>,
    return
  }
  func.func @transform_0(%arg0: i32) -> (i32, i32, i32) {
    %c0_i32 = arith.constant 0 : i32
    %c0_i32_0 = arith.constant 0 : i32
    %c0_i32_1 = arith.constant 0 : i32
    return %arg0, %c0_i32, %c0_i32_0 : i32, i32, i32
  }
  func.func @transform_1(%arg0: i32) -> (i32, i32) {
    %c0_i32 = arith.constant 0 : i32
    %c0_i32_0 = arith.constant 0 : i32
    %c0_i32_1 = arith.constant 0 : i32
    return %c0_i32, %c0_i32_0 : i32, i32
  }
  func.func @transform_2(%arg0: i32) -> (i32, i32) {
    %c0_i32 = arith.constant 0 : i32
    %c0_i32_0 = arith.constant 0 : i32
    return %arg0, %c0_i32 : i32, i32
  }
}

</mosaic_0001>

<llo_original>
// kernel: tpu_custom_call.1
$region0: #{tpu_custom_call.1}
  #allocation0 [shape = 'u32[]', space=smem, size = 0x4, offset = 0x4, fixed_abs, tag = 'smem constant byte address 0x4 - core index']
  #allocation1 [shape = 'u32[144,128]{1,0:T(1,128)}', space=vmem, size = 0x12000, scoped, tag = 'internal scratch']
  %s0 = inlined_call_operand.hbm [shape: f32[2,4,256], index: 0, kind: input, shape index: {}]
  %s1 = inlined_call_operand.hbm [shape: bf16[512,256], index: 1, kind: input, shape index: {}]
  %s2 = inlined_call_operand.hbm [shape: f32[2,256], index: 2, kind: output, shape index: {}]
  %s3 = sld [smem:[#allocation0]]
  $region26: #{tpu_custom_call.1} parent=0
    _
  %s5 = ssub.s32 1, %s3
  %s6 = scalar_select 0, %s5, %s3
  $region1: #{tpu_custom_call.1} parent=0
    #allocation2 [shape = 'u8[8192]{0}', space=vmem, size = 0x2000, scoped, tag = 'input window, operand 0, single buffered']
    #allocation3 [shape = 's32[1]{0}', space=sflag, size = 0x4, scoped, tag = 'scoped memory for tpu_custom_call.1']
    #allocation4 [shape = 's32[1]{0}', space=sflag, size = 0x4, scoped, tag = 'scoped memory for tpu_custom_call.1']
    #allocation5 [shape = 'u8[262144]{0}', space=vmem, size = 0x40000, scoped, tag = 'input window, operand 1, single buffered']
    #allocation6 [shape = 's32[1]{0}', space=sflag, size = 0x4, scoped, tag = 'scoped memory for tpu_custom_call.1']
    #allocation7 [shape = 'u8[2048]{0}', space=vmem, size = 0x800, scoped, tag = 'output window, operand 0, single buffered']
    %7 = vsyncpa [#allocation3], 0
    %8 = vsyncpa [#allocation6], 0
    %9 = vsyncpa [#allocation4], 0
    // Predicated region
    $region2: #{tpu_custom_call.1} parent=1 // pred_check
      _
    $region3: #{tpu_custom_call.1} parent=1 // pred_check_branch
      %11 = sbr.rel (0) target = $region5
    $region4: #{tpu_custom_call.1} parent=1 // pred_region
      %s13 = ssub.s32 256, 256
      %14 = vsyncadd [#allocation3], %s13
      %s15 = sshll.u32 [#allocation2], 4
      %s16 = int_to_ptr.vmem [resolvable:$true] %s15
      %21 = dma.hbm_to_vmem [thread:$0]  %s0, 256, %s16, [#allocation3], 128, 128, 8
    $region5: #{tpu_custom_call.1} parent=1 // pred_fallthru
      _
    // Predicated region
    $region6: #{tpu_custom_call.1} parent=1 // pred_check
      _
    $region7: #{tpu_custom_call.1} parent=1 // pred_check_branch
      %23 = sbr.rel (0) target = $region9
    $region8: #{tpu_custom_call.1} parent=1 // pred_region
      %s25 = ssub.s32 8192, 8192
      %26 = vsyncadd [#allocation6], %s25
      %s27 = sshll.u32 [#allocation5], 4
      %s28 = int_to_ptr.vmem [resolvable:$true] %s27
      %33 = dma.hbm_to_vmem [thread:$0]  %s1, 8192, %s28, [#allocation6], 128, 128, 8
    $region9: #{tpu_custom_call.1} parent=1 // pred_fallthru
      _
    // Predicated region
    $region10: #{tpu_custom_call.1} parent=1 // pred_check
      _
    $region11: #{tpu_custom_call.1} parent=1 // pred_check_branch
      %35 = sbr.rel (0) target = $region13
    $region12: #{tpu_custom_call.1} parent=1 // pred_region
      %36 = dma.done [#allocation3], 256
    $region13: #{tpu_custom_call.1} parent=1 // pred_fallthru
      _
    // Predicated region
    $region14: #{tpu_custom_call.1} parent=1 // pred_check
      _
    $region15: #{tpu_custom_call.1} parent=1 // pred_check_branch
      %38 = sbr.rel (0) target = $region17
    $region16: #{tpu_custom_call.1} parent=1 // pred_region
      %39 = dma.done [#allocation6], 8192
    $region17: #{tpu_custom_call.1} parent=1 // pred_fallthru
      _
    %v40 = vld [vmem:[#allocation2] sm:$0xff]
    %v41 = vld [vmem:[#allocation2 + $0x8] sm:$0xff]
    %v44 = vcombine.high %v40, %v40
    %v45 = vcombine.high %v41, %v41
    %vm48 = vcmask 1043456
    %v49 = vsel %vm48, %v40, 0.0
    %v50 = vrot.slane %v49, 4
    %v51 = vadd.f32 %v49, %v50
    %v52 = vrot.slane %v51, 2
    %v53 = vadd.f32 %v51, %v52
    %v54 = vrot.slane %v53, 1
    %v55 = vadd.f32 %v53, %v54
    %v56 = vsel %vm48, %v44, 0.0
    %v57 = vrot.slane %v56, 4
    %v58 = vadd.f32 %v56, %v57
    %v59 = vrot.slane %v58, 2
    %v60 = vadd.f32 %v58, %v59
    %v61 = vrot.slane %v60, 1
    %v62 = vadd.f32 %v60, %v61
    %v63 = vsel %vm48, %v41, 0.0
    %v64 = vrot.slane %v63, 4
    %v65 = vadd.f32 %v63, %v64
    %v66 = vrot.slane %v65, 2
    %v67 = vadd.f32 %v65, %v66
    %v68 = vrot.slane %v67, 1
    %v69 = vadd.f32 %v67, %v68
    %v70 = vsel %vm48, %v45, 0.0
    %v71 = vrot.slane %v70, 4
    %v72 = vadd.f32 %v70, %v71
    %v73 = vrot.slane %v72, 2
    %v74 = vadd.f32 %v72, %v73
    %v75 = vrot.slane %v74, 1
    %v76 = vadd.f32 %v74, %v75
    %v77 = vmul.f32 %v55, 0.25
    %v78 = vmul.f32 %v62, 0.25
    %v79 = vmul.f32 %v69, 0.25
    %v80 = vmul.f32 %v76, 0.25
    %v81 = vsel %vm48, %v40, -inf
    %v82 = vrot.slane %v81, 4
    %v83 = vmax.f32 %v81, %v82
    %v84 = vrot.slane %v83, 2
    %v85 = vmax.f32 %v83, %v84
    %v86 = vrot.slane %v85, 1
    %v87 = vmax.f32 %v85, %v86
    %v88 = vsel %vm48, %v44, -inf
    %v89 = vrot.slane %v88, 4
    %v90 = vmax.f32 %v88, %v89
    %v91 = vrot.slane %v90, 2
    %v92 = vmax.f32 %v90, %v91
    %v93 = vrot.slane %v92, 1
    %v94 = vmax.f32 %v92, %v93
    %v95 = vsel %vm48, %v41, -inf
    %v96 = vrot.slane %v95, 4
    %v97 = vmax.f32 %v95, %v96
    %v98 = vrot.slane %v97, 2
    %v99 = vmax.f32 %v97, %v98
    %v100 = vrot.slane %v99, 1
    %v101 = vmax.f32 %v99, %v100
    %v102 = vsel %vm48, %v45, -inf
    %v103 = vrot.slane %v102, 4
    %v104 = vmax.f32 %v102, %v103
    %v105 = vrot.slane %v104, 2
    %v106 = vmax.f32 %v104, %v105
    %v107 = vrot.slane %v106, 1
    %v108 = vmax.f32 %v106, %v107
    %vm113 = vcmask 1041409
    %v114 = vsel %vm113, %v79, %v77
    %v115 = vsel %vm113, %v80, %v78
    %v122 = vsel %vm113, %v101, %v87
    %v123 = vsel %vm113, %v108, %v94
    %v126 = vpack.c.bf16 %v114, %v114
    %v127 = vpack.c.bf16 %v115, %v115
    %v128 = vpack.c.bf16 %v122, %v122
    %v129 = vpack.c.bf16 %v123, %v123
    %v130 = vld [vmem:[#allocation5] sm:$0xff]
    %v131 = vld [vmem:[#allocation5 + $0x8] sm:$0xff]
    %v132 = vld [vmem:[#allocation5 + $0x10] sm:$0xff]
    %v133 = vld [vmem:[#allocation5 + $0x18] sm:$0xff]
    %v134 = vld [vmem:[#allocation5 + $0x20] sm:$0xff]
    %v135 = vld [vmem:[#allocation5 + $0x28] sm:$0xff]
    %v136 = vld [vmem:[#allocation5 + $0x30] sm:$0xff]
    %v137 = vld [vmem:[#allocation5 + $0x38] sm:$0xff]
    %v138 = vld [vmem:[#allocation5 + $0x40] sm:$0xff]
    %v139 = vld [vmem:[#allocation5 + $0x48] sm:$0xff]
    %v140 = vld [vmem:[#allocation5 + $0x50] sm:$0xff]
    %v141 = vld [vmem:[#allocation5 + $0x58] sm:$0xff]
    %v142 = vld [vmem:[#allocation5 + $0x60] sm:$0xff]
    %v143 = vld [vmem:[#allocation5 + $0x68] sm:$0xff]
    %v144 = vld [vmem:[#allocation5 + $0x70] sm:$0xff]
    %v145 = vld [vmem:[#allocation5 + $0x78] sm:$0xff]
    %v146 = vld [vmem:[#allocation5 + $0x80] sm:$0xff]
    %v147 = vld [vmem:[#allocation5 + $0x88] sm:$0xff]
    %v148 = vld [vmem:[#allocation5 + $0x90] sm:$0xff]
    %v149 = vld [vmem:[#allocation5 + $0x98] sm:$0xff]
    %v150 = vld [vmem:[#allocation5 + $0xa0] sm:$0xff]
    %v151 = vld [vmem:[#allocation5 + $0xa8] sm:$0xff]
    %v152 = vld [vmem:[#allocation5 + $0xb0] sm:$0xff]
    %v153 = vld [vmem:[#allocation5 + $0xb8] sm:$0xff]
    %v154 = vld [vmem:[#allocation5 + $0xc0] sm:$0xff]
    %v155 = vld [vmem:[#allocation5 + $0xc8] sm:$0xff]
    %v156 = vld [vmem:[#allocation5 + $0xd0] sm:$0xff]
    %v157 = vld [vmem:[#allocation5 + $0xd8] sm:$0xff]
    %v158 = vld [vmem:[#allocation5 + $0xe0] sm:$0xff]
    %v159 = vld [vmem:[#allocation5 + $0xe8] sm:$0xff]
    %v160 = vld [vmem:[#allocation5 + $0xf0] sm:$0xff]
    %v161 = vld [vmem:[#allocation5 + $0xf8] sm:$0xff]
    %v162 = vld [vmem:[#allocation5 + $0x100] sm:$0xff]
    %v163 = vld [vmem:[#allocation5 + $0x108] sm:$0xff]
    %v164 = vld [vmem:[#allocation5 + $0x110] sm:$0xff]
    %v165 = vld [vmem:[#allocation5 + $0x118] sm:$0xff]
    %v166 = vld [vmem:[#allocation5 + $0x120] sm:$0xff]
    %v167 = vld [vmem:[#allocation5 + $0x128] sm:$0xff]
    %v168 = vld [vmem:[#allocation5 + $0x130] sm:$0xff]
    %v169 = vld [vmem:[#allocation5 + $0x138] sm:$0xff]
    %v170 = vld [vmem:[#allocation5 + $0x140] sm:$0xff]
    %v171 = vld [vmem:[#allocation5 + $0x148] sm:$0xff]
    %v172 = vld [vmem:[#allocation5 + $0x150] sm:$0xff]
    %v173 = vld [vmem:[#allocation5 + $0x158] sm:$0xff]
    %v174 = vld [vmem:[#allocation5 + $0x160] sm:$0xff]
    %v175 = vld [vmem:[#allocation5 + $0x168] sm:$0xff]
    %v176 = vld [vmem:[#allocation5 + $0x170] sm:$0xff]
    %v177 = vld [vmem:[#allocation5 + $0x178] sm:$0xff]
    %v178 = vld [vmem:[#allocation5 + $0x180] sm:$0xff]
    %v179 = vld [vmem:[#allocation5 + $0x188] sm:$0xff]
    %v180 = vld [vmem:[#allocation5 + $0x190] sm:$0xff]
    %v181 = vld [vmem:[#allocation5 + $0x198] sm:$0xff]
    %v182 = vld [vmem:[#allocation5 + $0x1a0] sm:$0xff]
    %v183 = vld [vmem:[#allocation5 + $0x1a8] sm:$0xff]
    %v184 = vld [vmem:[#allocation5 + $0x1b0] sm:$0xff]
    %v185 = vld [vmem:[#allocation5 + $0x1b8] sm:$0xff]
    %v186 = vld [vmem:[#allocation5 + $0x1c0] sm:$0xff]
    %v187 = vld [vmem:[#allocation5 + $0x1c8] sm:$0xff]
    %v188 = vld [vmem:[#allocation5 + $0x1d0] sm:$0xff]
    %v189 = vld [vmem:[#allocation5 + $0x1d8] sm:$0xff]
    %v190 = vld [vmem:[#allocation5 + $0x1e0] sm:$0xff]
    %v191 = vld [vmem:[#allocation5 + $0x1e8] sm:$0xff]
    %v192 = vld [vmem:[#allocation5 + $0x1f0] sm:$0xff]
    %v193 = vld [vmem:[#allocation5 + $0x1f8] sm:$0xff]
    %v258 = vunpack.c.l.b16 %v130
    %v259 = vunpack.c.h.b16 %v130
    %v260 = vunpack.c.l.b16 %v131
    %v261 = vunpack.c.h.b16 %v131
    %v262 = vunpack.c.l.b16 %v132
    %v263 = vunpack.c.h.b16 %v132
    %v264 = vunpack.c.l.b16 %v133
    %v265 = vunpack.c.h.b16 %v133
    %v266 = vunpack.c.l.b16 %v134
    %v267 = vunpack.c.h.b16 %v134
    %v268 = vunpack.c.l.b16 %v135
    %v269 = vunpack.c.h.b16 %v135
    %v270 = vunpack.c.l.b16 %v136
    %v271 = vunpack.c.h.b16 %v136
    %v272 = vunpack.c.l.b16 %v137
    %v273 = vunpack.c.h.b16 %v137
    %v274 = vunpack.c.l.b16 %v138
    %v275 = vunpack.c.h.b16 %v138
    %v276 = vunpack.c.l.b16 %v139
    %v277 = vunpack.c.h.b16 %v139
    %v278 = vunpack.c.l.b16 %v140
    %v279 = vunpack.c.h.b16 %v140
    %v280 = vunpack.c.l.b16 %v141
    %v281 = vunpack.c.h.b16 %v141
    %v282 = vunpack.c.l.b16 %v142
    %v283 = vunpack.c.h.b16 %v142
    %v284 = vunpack.c.l.b16 %v143
    %v285 = vunpack.c.h.b16 %v143
    %v286 = vunpack.c.l.b16 %v144
    %v287 = vunpack.c.h.b16 %v144
    %v288 = vunpack.c.l.b16 %v145
    %v289 = vunpack.c.h.b16 %v145
    %v290 = vunpack.c.l.b16 %v146
    %v291 = vunpack.c.h.b16 %v146
    %v292 = vunpack.c.l.b16 %v147
    %v293 = vunpack.c.h.b16 %v147
    %v294 = vunpack.c.l.b16 %v148
    %v295 = vunpack.c.h.b16 %v148
    %v296 = vunpack.c.l.b16 %v149
    %v297 = vunpack.c.h.b16 %v149
    %v298 = vunpack.c.l.b16 %v150
    %v299 = vunpack.c.h.b16 %v150
    %v300 = vunpack.c.l.b16 %v151
    %v301 = vunpack.c.h.b16 %v151
    %v302 = vunpack.c.l.b16 %v152
    %v303 = vunpack.c.h.b16 %v152
    %v304 = vunpack.c.l.b16 %v153
    %v305 = vunpack.c.h.b16 %v153
    %v306 = vunpack.c.l.b16 %v154
    %v307 = vunpack.c.h.b16 %v154
    %v308 = vunpack.c.l.b16 %v155
    %v309 = vunpack.c.h.b16 %v155
    %v310 = vunpack.c.l.b16 %v156
    %v311 = vunpack.c.h.b16 %v156
    %v312 = vunpack.c.l.b16 %v157
    %v313 = vunpack.c.h.b16 %v157
    %v314 = vunpack.c.l.b16 %v158
    %v315 = vunpack.c.h.b16 %v158
    %v316 = vunpack.c.l.b16 %v159
    %v317 = vunpack.c.h.b16 %v159
    %v318 = vunpack.c.l.b16 %v160
    %v319 = vunpack.c.h.b16 %v160
    %v320 = vunpack.c.l.b16 %v161
    %v321 = vunpack.c.h.b16 %v161
    %v322 = vunpack.c.l.b16 %v162
    %v323 = vunpack.c.h.b16 %v162
    %v324 = vunpack.c.l.b16 %v163
    %v325 = vunpack.c.h.b16 %v163
    %v326 = vunpack.c.l.b16 %v164
    %v327 = vunpack.c.h.b16 %v164
    %v328 = vunpack.c.l.b16 %v165
    %v329 = vunpack.c.h.b16 %v165
    %v330 = vunpack.c.l.b16 %v166
    %v331 = vunpack.c.h.b16 %v166
    %v332 = vunpack.c.l.b16 %v167
    %v333 = vunpack.c.h.b16 %v167
    %v334 = vunpack.c.l.b16 %v168
    %v335 = vunpack.c.h.b16 %v168
    %v336 = vunpack.c.l.b16 %v169
    %v337 = vunpack.c.h.b16 %v169
    %v338 = vunpack.c.l.b16 %v170
    %v339 = vunpack.c.h.b16 %v170
    %v340 = vunpack.c.l.b16 %v171
    %v341 = vunpack.c.h.b16 %v171
    %v342 = vunpack.c.l.b16 %v172
    %v343 = vunpack.c.h.b16 %v172
    %v344 = vunpack.c.l.b16 %v173
    %v345 = vunpack.c.h.b16 %v173
    %v346 = vunpack.c.l.b16 %v174
    %v347 = vunpack.c.h.b16 %v174
    %v348 = vunpack.c.l.b16 %v175
    %v349 = vunpack.c.h.b16 %v175
    %v350 = vunpack.c.l.b16 %v176
    %v351 = vunpack.c.h.b16 %v176
    %v352 = vunpack.c.l.b16 %v177
    %v353 = vunpack.c.h.b16 %v177
    %v354 = vunpack.c.l.b16 %v178
    %v355 = vunpack.c.h.b16 %v178
    %v356 = vunpack.c.l.b16 %v179
    %v357 = vunpack.c.h.b16 %v179
    %v358 = vunpack.c.l.b16 %v180
    %v359 = vunpack.c.h.b16 %v180
    %v360 = vunpack.c.l.b16 %v181
    %v361 = vunpack.c.h.b16 %v181
    %v362 = vunpack.c.l.b16 %v182
    %v363 = vunpack.c.h.b16 %v182
    %v364 = vunpack.c.l.b16 %v183
    %v365 = vunpack.c.h.b16 %v183
    %v366 = vunpack.c.l.b16 %v184
    %v367 = vunpack.c.h.b16 %v184
    %v368 = vunpack.c.l.b16 %v185
    %v369 = vunpack.c.h.b16 %v185
    %v370 = vunpack.c.l.b16 %v186
    %v371 = vunpack.c.h.b16 %v186
    %v372 = vunpack.c.l.b16 %v187
    %v373 = vunpack.c.h.b16 %v187
    %v374 = vunpack.c.l.b16 %v188
    %v375 = vunpack.c.h.b16 %v188
    %v376 = vunpack.c.l.b16 %v189
    %v377 = vunpack.c.h.b16 %v189
    %v378 = vunpack.c.l.b16 %v190
    %v379 = vunpack.c.h.b16 %v190
    %v380 = vunpack.c.l.b16 %v191
    %v381 = vunpack.c.h.b16 %v191
    %v382 = vunpack.c.l.b16 %v192
    %v383 = vunpack.c.h.b16 %v192
    %v384 = vunpack.c.l.b16 %v193
    %v385 = vunpack.c.h.b16 %v193
    %v386 = vpack.c.b16 %v260, %v258
    %v387 = vpack.c.b16 %v261, %v259
    %v388 = vpack.c.b16 %v264, %v262
    %v389 = vpack.c.b16 %v265, %v263
    %v390 = vpack.c.b16 %v268, %v266
    %v391 = vpack.c.b16 %v269, %v267
    %v392 = vpack.c.b16 %v272, %v270
    %v393 = vpack.c.b16 %v273, %v271
    %v394 = vpack.c.b16 %v276, %v274
    %v395 = vpack.c.b16 %v277, %v275
    %v396 = vpack.c.b16 %v280, %v278
    %v397 = vpack.c.b16 %v281, %v279
    %v398 = vpack.c.b16 %v284, %v282
    %v399 = vpack.c.b16 %v285, %v283
    %v400 = vpack.c.b16 %v288, %v286
    %v401 = vpack.c.b16 %v289, %v287
    %v402 = vpack.c.b16 %v292, %v290
    %v403 = vpack.c.b16 %v293, %v291
    %v404 = vpack.c.b16 %v296, %v294
    %v405 = vpack.c.b16 %v297, %v295
    %v406 = vpack.c.b16 %v300, %v298
    %v407 = vpack.c.b16 %v301, %v299
    %v408 = vpack.c.b16 %v304, %v302
    %v409 = vpack.c.b16 %v305, %v303
    %v410 = vpack.c.b16 %v308, %v306
    %v411 = vpack.c.b16 %v309, %v307
    %v412 = vpack.c.b16 %v312, %v310
    %v413 = vpack.c.b16 %v313, %v311
    %v414 = vpack.c.b16 %v316, %v314
    %v415 = vpack.c.b16 %v317, %v315
    %v416 = vpack.c.b16 %v320, %v318
    %v417 = vpack.c.b16 %v321, %v319
    %v418 = vpack.c.b16 %v324, %v322
    %v419 = vpack.c.b16 %v325, %v323
    %v420 = vpack.c.b16 %v328, %v326
    %v421 = vpack.c.b16 %v329, %v327
    %v422 = vpack.c.b16 %v332, %v330
    %v423 = vpack.c.b16 %v333, %v331
    %v424 = vpack.c.b16 %v336, %v334
    %v425 = vpack.c.b16 %v337, %v335
    %v426 = vpack.c.b16 %v340, %v338
    %v427 = vpack.c.b16 %v341, %v339
    %v428 = vpack.c.b16 %v344, %v342
    %v429 = vpack.c.b16 %v345, %v343
    %v430 = vpack.c.b16 %v348, %v346
    %v431 = vpack.c.b16 %v349, %v347
    %v432 = vpack.c.b16 %v352, %v350
    %v433 = vpack.c.b16 %v353, %v351
    %v434 = vpack.c.b16 %v356, %v354
    %v435 = vpack.c.b16 %v357, %v355
    %v436 = vpack.c.b16 %v360, %v358
    %v437 = vpack.c.b16 %v361, %v359
    %v438 = vpack.c.b16 %v364, %v362
    %v439 = vpack.c.b16 %v365, %v363
    %v440 = vpack.c.b16 %v368, %v366
    %v441 = vpack.c.b16 %v369, %v367
    %v442 = vpack.c.b16 %v372, %v370
    %v443 = vpack.c.b16 %v373, %v371
    %v444 = vpack.c.b16 %v376, %v374
    %v445 = vpack.c.b16 %v377, %v375
    %v446 = vpack.c.b16 %v380, %v378
    %v447 = vpack.c.b16 %v381, %v379
    %v448 = vpack.c.b16 %v384, %v382
    %v449 = vpack.c.b16 %v385, %v383
    %514 = vmatprep.subr.bf16.mxu0 %v387
    %515 = vmatpush1.bf16.msra.mxu0 %v386
    %516 = vmatprep.subr.bf16.mxu0 %v389
    %517 = vmatpush1.bf16.msra.mxu0 %v388
    %518 = vmatprep.subr.bf16.mxu0 %v391
    %519 = vmatpush1.bf16.msra.mxu0 %v390
    %520 = vmatprep.subr.bf16.mxu0 %v393
    %521 = vmatpush1.bf16.msra.mxu0 %v392
    %522 = vmatprep.subr.bf16.mxu0 %v395
    %523 = vmatpush1.bf16.msra.mxu0 %v394
    %524 = vmatprep.subr.bf16.mxu0 %v397
    %525 = vmatpush1.bf16.msra.mxu0 %v396
    %526 = vmatprep.subr.bf16.mxu0 %v399
    %527 = vmatpush1.bf16.msra.mxu0 %v398
    %528 = vmatprep.subr.bf16.mxu0 %v401
    %529 = vmatpush1.bf16.msra.mxu0 %v400
    %530 = vmatprep.subr.bf16.mxu0 %v403
    %531 = vmatpush1.bf16.msra.mxu0 %v402
    %532 = vmatprep.subr.bf16.mxu0 %v405
    %533 = vmatpush1.bf16.msra.mxu0 %v404
    %534 = vmatprep.subr.bf16.mxu0 %v407
    %535 = vmatpush1.bf16.msra.mxu0 %v406
    %536 = vmatprep.subr.bf16.mxu0 %v409
    %537 = vmatpush1.bf16.msra.mxu0 %v408
    %538 = vmatprep.subr.bf16.mxu0 %v411
    %539 = vmatpush1.bf16.msra.mxu0 %v410
    %540 = vmatprep.subr.bf16.mxu0 %v413
    %541 = vmatpush1.bf16.msra.mxu0 %v412
    %542 = vmatprep.subr.bf16.mxu0 %v415
    %543 = vmatpush1.bf16.msra.mxu0 %v414
    %544 = vmatprep.subr.bf16.mxu0 %v417
    %545 = vmatpush1.bf16.msra.mxu0 %v416
    %546 = vmatprep.mubr.bf16.mxu0 %v127
    %547 = vmatmul.mubr.bf16.gmra.mrb[0].mxu0 %v126
    %v548 = vpop.f32.mrb[0].mxu0
    %v549 = vadd.f32 0.0, %v548
    %v550 = vpop.f32.mrb[0].mxu0
    %v551 = vadd.f32 0.0, %v550
    %v552 = vpop.f32.mrb[0].mxu0
    %v553 = vpop.f32.mrb[0].mxu0
    %554 = vdwg.mxu0
    %555 = vmatprep.subr.bf16.mxu0 %v419
    %556 = vmatpush1.bf16.msra.mxu0 %v418
    %557 = vmatprep.subr.bf16.mxu0 %v421
    %558 = vmatpush1.bf16.msra.mxu0 %v420
    %559 = vmatprep.subr.bf16.mxu0 %v423
    %560 = vmatpush1.bf16.msra.mxu0 %v422
    %561 = vmatprep.subr.bf16.mxu0 %v425
    %562 = vmatpush1.bf16.msra.mxu0 %v424
    %563 = vmatprep.subr.bf16.mxu0 %v427
    %564 = vmatpush1.bf16.msra.mxu0 %v426
    %565 = vmatprep.subr.bf16.mxu0 %v429
    %566 = vmatpush1.bf16.msra.mxu0 %v428
    %567 = vmatprep.subr.bf16.mxu0 %v431
    %568 = vmatpush1.bf16.msra.mxu0 %v430
    %569 = vmatprep.subr.bf16.mxu0 %v433
    %570 = vmatpush1.bf16.msra.mxu0 %v432
    %571 = vmatprep.subr.bf16.mxu0 %v435
    %572 = vmatpush1.bf16.msra.mxu0 %v434
    %573 = vmatprep.subr.bf16.mxu0 %v437
    %574 = vmatpush1.bf16.msra.mxu0 %v436
    %575 = vmatprep.subr.bf16.mxu0 %v439
    %576 = vmatpush1.bf16.msra.mxu0 %v438
    %577 = vmatprep.subr.bf16.mxu0 %v441
    %578 = vmatpush1.bf16.msra.mxu0 %v440
    %579 = vmatprep.subr.bf16.mxu0 %v443
    %580 = vmatpush1.bf16.msra.mxu0 %v442
    %581 = vmatprep.subr.bf16.mxu0 %v445
    %582 = vmatpush1.bf16.msra.mxu0 %v444
    %583 = vmatprep.subr.bf16.mxu0 %v447
    %584 = vmatpush1.bf16.msra.mxu0 %v446
    %585 = vmatprep.subr.bf16.mxu0 %v449
    %586 = vmatpush1.bf16.msra.mxu0 %v448
    %587 = vmatprep.mubr.bf16.mxu0 %v129
    %588 = vmatmul.mubr.bf16.gmra.mrb[0].mxu0 %v128
    %v589 = vpop.f32.mrb[0].mxu0
    %v590 = vadd.f32 %v549, %v589
    %v591 = vpop.f32.mrb[0].mxu0
    %v592 = vadd.f32 %v551, %v591
    %v593 = vpop.f32.mrb[0].mxu0
    %v594 = vpop.f32.mrb[0].mxu0
    %595 = vdwg.mxu0
    %v596 = vxor.u32 %v590, 2147483648
    %v597 = vxor.u32 %v592, 2147483648
    %v598 = vmul.f32 %v596, 1.442695
    %v599 = vpow.pop %v598
    %v600 = vmul.f32 %v597, 1.442695
    %v601 = vpow.pop %v600
    %v602 = vadd.f32 %v599, 1.0
    %v603 = vadd.f32 %v601, 1.0
    %v604 = vrcp.pop %v602
    %v605 = vmul.f32 1.0, %v604
    %v606 = vrcp.pop %v603
    %v607 = vmul.f32 1.0, %v606
    %v610 = vcombine.low %v605, %v607
    %v612 = vunpack.c.l.s4 1983009808
    %v613 = vunpack.c.0.s8 %v612
    %v614 = vlaneseq
    %v615 = vshrl.u32 %v614, 7
    %v616 = vsub.s32 %v613, %v615
    %v617 = vrot.slane %v610, %v616
    %619 = vst [vmem:[#allocation7] sm:$0xf] %v617
    // Predicated region
    $region18: #{tpu_custom_call.1} parent=1 // pred_check
      _
    $region19: #{tpu_custom_call.1} parent=1 // pred_check_branch
      %621 = sbr.rel (0) target = $region21
    $region20: #{tpu_custom_call.1} parent=1 // pred_region
      %s623 = ssub.s32 64, 64
      %624 = vsyncadd [#allocation4], %s623
      %s626 = sshll.u32 [#allocation7], 4
      %s627 = int_to_ptr.vmem [resolvable:$true] %s626
      %629 = dma.vmem_to_hbm [thread:$0]  %s627, 64, %s2, [#allocation4]
    $region21: #{tpu_custom_call.1} parent=1 // pred_fallthru
      _
    // Predicated region
    $region22: #{tpu_custom_call.1} parent=1 // pred_check
      _
    $region23: #{tpu_custom_call.1} parent=1 // pred_check_branch
      %631 = sbr.rel (0) target = $region25
    $region24: #{tpu_custom_call.1} parent=1 // pred_region
      %632 = dma.done [#allocation4], 64
    $region25: #{tpu_custom_call.1} parent=1 // pred_fallthru
      _
    %633 = vsyncpa [#allocation3], 1
    %634 = vsyncpa [#allocation6], 1
    %635 = vsyncpa [#allocation4], 1

</llo_original>
